<compile_context>
chip_gen: v7x
topology: tpu7x:2x2x1
jax: 0.10.0
libtpu: 0.0.40
codegen_flags: <defaults>
</compile_context>

<pallas_src>
import jax
import jax.numpy as jnp
from jax.experimental import pallas as pl
from jax.experimental.pallas import tpu as pltpu

LANE = 128  # TPU vreg lane width


# ---------------------------------------------------------------------------
# Kernel
# ---------------------------------------------------------------------------

def _shift_kernel(j_ref, ep_ref, z_ref, o_ref):
    """o = z * (endpoints[j+1] - endpoints[j]) + endpoints[j] for one row tile."""
    j = j_ref[0]                                   # scalar index from SMEM
    lo = ep_ref[j].astype(jnp.float32)             # endpoints[j]
    hi = ep_ref[j + 1].astype(jnp.float32)         # endpoints[j + 1]
    scale = hi - lo
    z = z_ref[...].astype(jnp.float32)
    o_ref[...] = (z * scale + lo).astype(o_ref.dtype)


# ---------------------------------------------------------------------------
# Wrapper
# ---------------------------------------------------------------------------

def shift_mapper_forward(z, j, endpoints, *, max_rows_per_tile=512):
    """ShiftMapper forward.

    z         : array of any shape / dtype (f32 or bf16).
    j         : scalar int attribute index (0 <= j < num_attributes).
    endpoints : (num_attributes + 1,) learned parameter vector.
    """
    orig_shape = z.shape
    orig_dtype = z.dtype

    # Flatten to a lane-dense (rows, 128) view, padding the tail.
    total = int(z.size)
    rows = pl.cdiv(total, LANE)
    tm = min(max_rows_per_tile, ((rows + 7) // 8) * 8)   # multiple of 8 sublanes
    rows_pad = pl.cdiv(rows, tm) * tm
    total_pad = rows_pad * LANE

    zf = z.reshape(-1)
    if total_pad != total:
        zf = jnp.pad(zf, (0, total_pad - total))
    z2 = zf.reshape(rows_pad, LANE)

    j_arr = jnp.asarray(j, jnp.int32).reshape((1,))       # scalar prefetch arg
    ep = jnp.asarray(endpoints, jnp.float32)

    grid = (rows_pad // tm,)
    out2 = pl.pallas_call(
        _shift_kernel,
        out_shape=jax.ShapeDtypeStruct((rows_pad, LANE), orig_dtype),
        grid_spec=pltpu.PrefetchScalarGridSpec(
            num_scalar_prefetch=1,                         # j -> SMEM
            grid=grid,
            in_specs=[
                pl.BlockSpec(memory_space=pltpu.MemorySpace.SMEM),   # endpoints
                pl.BlockSpec((tm, LANE), lambda i, j_ref: (i, 0)),   # z tile
            ],
            out_specs=pl.BlockSpec((tm, LANE), lambda i, j_ref: (i, 0)),
        ),
        compiler_params=pltpu.CompilerParams(
            dimension_semantics=("parallel",),             # shard rows across TCs (v7x)
        ),
    )(j_arr, ep, z2)

    return out2.reshape(-1)[:total].reshape(orig_shape)


# ---------------------------------------------------------------------------
# Pure-JAX reference (numerical sanity check only)
# ---------------------------------------------------------------------------

def shift_mapper_reference(z, j, endpoints):
    ep = jnp.asarray(endpoints, jnp.float32)
    out = z.astype(jnp.float32) * (ep[j + 1] - ep[j]) + ep[j]
    return out.astype(z.dtype)


# ---------------------------------------------------------------------------

if __name__ == "__main__":
    key = jax.random.PRNGKey(0)
    k_ep, k_z1, k_z2, k_z3 = jax.random.split(key, 4)

    num_attributes = 4
    endpoints = jax.random.normal(k_ep, (num_attributes + 1,), jnp.float32)

    # Case 1: small NCHW-style latent, f32.
    z1 = jax.random.normal(k_z1, (2, 4, 16, 16), jnp.float32)
    j1 = 2
    out1 = jax.block_until_ready(shift_mapper_forward(z1, j1, endpoints))
    ref1 = shift_mapper_reference(z1, j1, endpoints)
    assert out1.shape == z1.shape and out1.dtype == z1.dtype
    assert float(jnp.max(jnp.abs(out1 - ref1))) < 1e-5

    # Case 2: odd, non-aligned shape (exercises tail padding), f32.
    z2 = jax.random.normal(k_z2, (3, 37, 41), jnp.float32)
    j2 = 0
    out2 = jax.block_until_ready(shift_mapper_forward(z2, j2, endpoints))
    ref2 = shift_mapper_reference(z2, j2, endpoints)
    assert out2.shape == z2.shape
    assert float(jnp.max(jnp.abs(out2 - ref2))) < 1e-5

    # Case 3: bf16 activations, multiple grid tiles (rows_pad > 512).
    z3 = jax.random.normal(k_z3, (2, 64, 32, 32), jnp.float32).astype(jnp.bfloat16)
    j3 = 3
    out3 = jax.block_until_ready(shift_mapper_forward(z3, j3, endpoints))
    ref3 = shift_mapper_reference(z3, j3, endpoints)
    assert out3.shape == z3.shape and out3.dtype == jnp.bfloat16
    diff3 = float(jnp.max(jnp.abs(out3.astype(jnp.float32) - ref3.astype(jnp.float32))))
    assert diff3 < 5e-2, f"bf16 mismatch vs reference: {diff3}"

    print("KERNEL_OK")
</pallas_src>

<mosaic_0001>
module attributes {stable_mosaic.version = 11 : i64} {
  func.func @_shift_kernel(%arg0: i32, %arg1: memref<1xi32, #tpu.memory_space<smem>>, %arg2: memref<5xf32, #tpu.memory_space<smem>>, %arg3: memref<16x128xf32, #tpu.memory_space<vmem>>, %arg4: memref<16x128xf32, #tpu.memory_space<vmem>>) attributes {dimension_semantics = [#tpu.dimension_semantics<parallel>], iteration_bounds = array<i64: 1>, scalar_prefetch = 1 : i64, scratch_operands = 0 : i64, tpu.core_type = #tpu.core_type<tc>, window_params = [{transform_indices = @transform_0, window_bounds = array<i64: 5>}, {transform_indices = @transform_1, window_bounds = array<i64: 16, 128>}, {transform_indices = @transform_2, window_bounds = array<i64: 16, 128>}]} {
    %c0 = arith.constant 0 : index
    %0 = memref.load %arg1[%c0] : memref<1xi32, #tpu.memory_space<smem>>
    %1 = arith.index_cast %0 : i32 to index
    %2 = memref.load %arg2[%1] : memref<5xf32, #tpu.memory_space<smem>>
    %c1_i32 = arith.constant 1 : i32
    %3 = arith.addi %0, %c1_i32 : i32
    %4 = arith.index_cast %3 : i32 to index
    %5 = memref.load %arg2[%4] : memref<5xf32, #tpu.memory_space<smem>>
    %6 = arith.subf %5, %2 : f32
    %c0_0 = arith.constant 0 : index
    %c0_1 = arith.constant 0 : index
    %7 = vector.load %arg3[%c0_0, %c0_1] : memref<16x128xf32, #tpu.memory_space<vmem>>, vector<16x128xf32>
    %8 = vector.broadcast %6 : f32 to vector<16x128xf32>
    %9 = arith.mulf %7, %8 : vector<16x128xf32>
    %10 = vector.broadcast %2 : f32 to vector<16x128xf32>
    %11 = arith.addf %9, %10 : vector<16x128xf32>
    %c0_2 = arith.constant 0 : index
    %c0_3 = arith.constant 0 : index
    %12 = vector.load %arg4[%c0_2, %c0_3] : memref<16x128xf32, #tpu.memory_space<vmem>>, vector<16x128xf32>
    tpu.vector_store %arg4[%c0_2, %c0_3], %11 {strides = array<i32>} : memref<16x128xf32, #tpu.memory_space<vmem>>, vector<16x128xf32>,
    return
  }
  func.func @transform_0(%arg0: i32, %arg1: memref<1xi32, #tpu.memory_space<smem>>) -> i32 {
    %c0_i32 = arith.constant 0 : i32
    %c0_i32_0 = arith.constant 0 : i32
    return %c0_i32 : i32
  }
  func.func @transform_1(%arg0: i32, %arg1: memref<1xi32, #tpu.memory_space<smem>>) -> (i32, i32) {
    %c0_i32 = arith.constant 0 : i32
    %c0_i32_0 = arith.constant 0 : i32
    return %arg0, %c0_i32 : i32, i32
  }
  func.func @transform_2(%arg0: i32, %arg1: memref<1xi32, #tpu.memory_space<smem>>) -> (i32, i32) {
    %c0_i32 = arith.constant 0 : i32
    %c0_i32_0 = arith.constant 0 : i32
    return %arg0, %c0_i32 : i32, i32
  }
}

</mosaic_0001>

<llo_original>
// kernel: tpu_custom_call.1
$region0: #{tpu_custom_call.1}
  #allocation0 [shape = 'u32[]', space=smem, size = 0x4, offset = 0x4, fixed_abs, tag = 'smem constant byte address 0x4 - core index']
  #allocation1 [shape = 'u32[144,128]{1,0:T(1,128)}', space=vmem, size = 0x12000, scoped, tag = 'internal scratch']
  #allocation2 [shape = 's32[1]{0}', space=sflag, size = 0x4, scoped, tag = 'scoped memory for tpu_custom_call.1']
  #allocation3 [shape = 's32[1]{0:T(128)S(6)}', space=smem, size = 0x200, scoped, tag = 'prefetched SMEM operand 0']
  %s0 = inlined_call_operand.<no memory space> [shape: s32[1], index: 0, kind: input, shape index: {}]
  %s1 = inlined_call_operand.vmem [shape: f32[5], index: 1, kind: input, shape index: {}]
  %s2 = inlined_call_operand.hbm [shape: f32[16,128], index: 2, kind: input, shape index: {}]
  %s3 = inlined_call_operand.hbm [shape: f32[16,128], index: 3, kind: output, shape index: {}]
  %s4 = sld [smem:[#allocation0]]
  $region26: #{tpu_custom_call.1} parent=0
    _
  %s6 = ssub.s32 1, %s4
  %s7 = scalar_select 0, %s6, %s4
  %8 = sst [smem:[#allocation3]] %s0
  $region1: #{tpu_custom_call.1} parent=0
    #allocation4 [shape = 'u8[512]{0}', space=smem, size = 0x200, scoped, tag = 'input window, operand 1, single buffered']
    #allocation5 [shape = 's32[1]{0}', space=sflag, size = 0x4, scoped, tag = 'scoped memory for tpu_custom_call.1']
    #allocation6 [shape = 's32[1]{0}', space=sflag, size = 0x4, scoped, tag = 'scoped memory for tpu_custom_call.1']
    #allocation7 [shape = 's32[1]{0}', space=sflag, size = 0x4, scoped, tag = 'scoped memory for tpu_custom_call.1']
    #allocation8 [shape = 'u8[8192]{0}', space=vmem, size = 0x2000, scoped, tag = 'input window, operand 2, single buffered']
    #allocation9 [shape = 'u8[8192]{0}', space=vmem, size = 0x2000, scoped, tag = 'output window, operand 0, single buffered']
    %9 = vsyncpa [#allocation7], 0
    %10 = vsyncpa [#allocation5], 0
    %11 = vsyncpa [#allocation6], 0
    // Predicated region
    $region2: #{tpu_custom_call.1} parent=1 // pred_check
      _
    $region3: #{tpu_custom_call.1} parent=1 // pred_check_branch
      %13 = sbr.rel (0) target = $region5
    $region4: #{tpu_custom_call.1} parent=1 // pred_region
      %s15 = ssub.s32 16, 16
      %16 = vsyncadd [#allocation7], %s15
      %s18 = sshll.u32 %s1, 4
      %s19 = int_to_ptr.vmem [resolvable:$true] %s18
      %21 = dma.vmem_to_smem %s19, 16, [#allocation4], [#allocation7]
    $region5: #{tpu_custom_call.1} parent=1 // pred_fallthru
      _
    // Predicated region
    $region6: #{tpu_custom_call.1} parent=1 // pred_check
      _
    $region7: #{tpu_custom_call.1} parent=1 // pred_check_branch
      %23 = sbr.rel (0) target = $region9
    $region8: #{tpu_custom_call.1} parent=1 // pred_region
      %s25 = ssub.s32 256, 256
      %26 = vsyncadd [#allocation5], %s25
      %s27 = sshll.u32 [#allocation8], 4
      %s28 = int_to_ptr.vmem [resolvable:$true] %s27
      %33 = dma.hbm_to_vmem [thread:$0]  %s2, 256, %s28, [#allocation5], 128, 128, 8
    $region9: #{tpu_custom_call.1} parent=1 // pred_fallthru
      _
    // Predicated region
    $region10: #{tpu_custom_call.1} parent=1 // pred_check
      _
    $region11: #{tpu_custom_call.1} parent=1 // pred_check_branch
      %35 = sbr.rel (0) target = $region13
    $region12: #{tpu_custom_call.1} parent=1 // pred_region
      %36 = dma.done [#allocation7], 16
    $region13: #{tpu_custom_call.1} parent=1 // pred_fallthru
      _
    // Predicated region
    $region14: #{tpu_custom_call.1} parent=1 // pred_check
      _
    $region15: #{tpu_custom_call.1} parent=1 // pred_check_branch
      %38 = sbr.rel (0) target = $region17
    $region16: #{tpu_custom_call.1} parent=1 // pred_region
      %39 = dma.done [#allocation5], 256
    $region17: #{tpu_custom_call.1} parent=1 // pred_fallthru
      _
    %40 = sfence
    %s41 = sld [smem:[#allocation3]]
    %s42 = sld [smem:[#allocation4 + %s41]]
    %s43 = sadd.s32 %s41, 1
    %s44 = sld [smem:[#allocation4 + %s43]]
    %s45 = ssub.f32 %s44, %s42
    %v46 = vld [vmem:[#allocation8] sm:$0xff]
    %v47 = vld [vmem:[#allocation8 + $0x8] sm:$0xff]
    %v48 = vstv %s45
    %v49 = vmul.f32 %v46, %v48
    %v50 = vmul.f32 %v47, %v48
    %v51 = vstv %s42
    %v52 = vadd.f32 %v49, %v51
    %v53 = vadd.f32 %v50, %v51
    %54 = vst [vmem:[#allocation9] sm:$0xff] %v52
    %55 = vst [vmem:[#allocation9 + $0x8] sm:$0xff] %v53
    // Predicated region
    $region18: #{tpu_custom_call.1} parent=1 // pred_check
      _
    $region19: #{tpu_custom_call.1} parent=1 // pred_check_branch
      %57 = sbr.rel (0) target = $region21
    $region20: #{tpu_custom_call.1} parent=1 // pred_region
      %s59 = ssub.s32 256, 256
      %60 = vsyncadd [#allocation6], %s59
      %s61 = sshll.u32 [#allocation9], 4
      %s62 = int_to_ptr.vmem [resolvable:$true] %s61
      %67 = dma.vmem_to_hbm [thread:$0]  %s62, 256, %s3, [#allocation6], 128, 128, 8
    $region21: #{tpu_custom_call.1} parent=1 // pred_fallthru
      _
    // Predicated region
    $region22: #{tpu_custom_call.1} parent=1 // pred_check
      _
    $region23: #{tpu_custom_call.1} parent=1 // pred_check_branch
      %69 = sbr.rel (0) target = $region25
    $region24: #{tpu_custom_call.1} parent=1 // pred_region
      %70 = dma.done [#allocation6], 256
    $region25: #{tpu_custom_call.1} parent=1 // pred_fallthru
      _
    %71 = vsyncpa [#allocation5], 1
    %72 = vsyncpa [#allocation6], 1
    %73 = vsyncpa [#allocation7], 1

</llo_original>
